<compile_context>
chip_gen: v7x
topology: tpu7x:2x2x1
jax: 0.10.0
libtpu: 0.0.40
codegen_flags: <defaults>
</compile_context>

<pallas_src>
import math
import functools

import jax
import jax.numpy as jnp
from jax import lax
from jax.experimental import pallas as pl
from jax.experimental.pallas import tpu as pltpu

MIN_NORM = 1e-15
MIN_NORM_SQ = MIN_NORM * MIN_NORM
EPS_F32 = 4e-3          # PoincareBall.eps[torch.float32]
# 1 - 1e-15 rounds to 1.0 in f32 (no-op clamp -> possible inf); use a real f32 guard.
# For valid (projected) inputs sqrt(c)*norm <= 1 - 4e-3, so this never changes results.
ARTANH_CLAMP = 1e-7


# ----- PoincareBall helpers (pure jnp; used for param prep and test inputs) -----

def _artanh(x):
    x = jnp.clip(x, -1.0 + ARTANH_CLAMP, 1.0 - ARTANH_CLAMP)
    return 0.5 * (jnp.log1p(x) - jnp.log1p(-x))


def _row_norm(x):
    return jnp.maximum(jnp.sqrt(jnp.sum(x * x, axis=-1, keepdims=True)), MIN_NORM)


def _proj(x, c):
    norm = _row_norm(x)
    maxnorm = (1.0 - EPS_F32) / math.sqrt(c)
    return jnp.where(norm > maxnorm, x / norm * maxnorm, x)


def _expmap0(u, c):
    sqrt_c = math.sqrt(c)
    u_norm = _row_norm(u)
    return jnp.tanh(sqrt_c * u_norm) * u / (sqrt_c * u_norm)


# ------------------------------- Pallas kernel -------------------------------

def hnn_kernel(x_ref, wT_ref, b_ref, y2_ref, o_ref, *, c, mxu_dtype):
    sqrt_c = math.sqrt(c)
    inv_sqrt_c = 1.0 / sqrt_c
    maxnorm = (1.0 - EPS_F32) * inv_sqrt_c

    x = x_ref[...].astype(jnp.float32)                  # (tm, din_p)
    y = b_ref[...].astype(jnp.float32)                  # (1, dout_p) = hyp_bias (precomputed)
    y2 = y2_ref[0]                                      # scalar ||hyp_bias||^2 (SMEM)

    # MXU matmul (bf16 operands by default), f32 accumulation.
    mx = jnp.dot(x.astype(mxu_dtype), wT_ref[...],
                 preferred_element_type=jnp.float32)    # (tm, dout_p)

    # ----- HypLinear: mobius_matvec(W, x, c) + proj --------------------------
    x_sumsq = jnp.sum(x * x, axis=-1, keepdims=True)            # XLU reduce 1
    inv_x_norm = lax.rsqrt(jnp.maximum(x_sumsq, MIN_NORM_SQ))   # = 1/clamp(||x||)
    x_norm = x_sumsq * inv_x_norm

    mx_sumsq = jnp.sum(mx * mx, axis=-1, keepdims=True)         # XLU reduce 2
    inv_mx_norm = lax.rsqrt(jnp.maximum(mx_sumsq, MIN_NORM_SQ))
    mx_norm = mx_sumsq * inv_mx_norm

    r = jnp.maximum(mx_norm, MIN_NORM) * inv_x_norm * _artanh(sqrt_c * x_norm)
    mv_scale = jnp.tanh(r) * inv_mx_norm * inv_sqrt_c           # (tm,1), >= 0
    # zero-row mask on the scale column (replaces full-width all(mx == 0) + where)
    mv_scale = jnp.where(mx_sumsq == 0.0, 0.0, mv_scale)

    # ||mv|| derived analytically (mv = mv_scale * mx, mv_scale >= 0)
    mv_norm = jnp.maximum(mv_scale * mx_norm, MIN_NORM)
    proj1 = jnp.where(mv_norm > maxnorm, maxnorm / mv_norm, 1.0)   # exact division
    res = (mv_scale * proj1) * mx                                  # one wide mul
    res_norm = jnp.minimum(mv_norm, maxnorm)                       # post-proj norm analytically
    x2 = res_norm * res_norm                                       # ||res||^2

    # ----- HypLinear bias (use_bias=True): mobius_add(res, hyp_bias) + proj ---
    xy = jnp.sum(res * y, axis=-1, keepdims=True)                  # XLU reduce 3
    coef_x = 1.0 + 2.0 * c * xy + c * y2
    coef_y = 1.0 - c * x2
    denom = jnp.maximum(1.0 + 2.0 * c * xy + (c * c) * x2 * y2, MIN_NORM)
    inv_denom = 1.0 / denom                                        # exact (tm,1) division
    a_s = coef_x * inv_denom
    b_s = coef_y * inv_denom
    add = a_s * res + b_s * y                                      # (tm, dout_p)

    # ||add||^2 analytically: ||a*res + b*y||^2 = a^2*x2 + 2ab*xy + b^2*y2
    add_sumsq = jnp.maximum(a_s * a_s * x2 + 2.0 * (a_s * b_s) * xy + (b_s * b_s) * y2, 0.0)
    inv_add_norm = lax.rsqrt(jnp.maximum(add_sumsq, MIN_NORM_SQ))
    add_norm = add_sumsq * inv_add_norm
    proj2 = jnp.where(add_norm > maxnorm, maxnorm / add_norm, 1.0)
    h_norm = jnp.minimum(add_norm, maxnorm)                        # ||proj(add)||
    inv_h_norm = jnp.where(add_norm > maxnorm, 1.0 / maxnorm, inv_add_norm)

    # ----- HypAct: relu(logmap0(h)) -> proj_tan0 (identity) -> proj(expmap0) --
    log_scale = inv_sqrt_c * _artanh(sqrt_c * h_norm) * inv_h_norm
    # proj2, log_scale >= 0 commute with ReLU, so fold both column scales together.
    xt = (proj2 * log_scale) * jnp.maximum(add, 0.0)               # (tm, dout_p)

    xt_sumsq = jnp.sum(xt * xt, axis=-1, keepdims=True)            # XLU reduce 4
    inv_u_norm = lax.rsqrt(jnp.maximum(xt_sumsq, MIN_NORM_SQ))
    u_norm = jnp.maximum(xt_sumsq * inv_u_norm, MIN_NORM)
    t = jnp.tanh(sqrt_c * u_norm)
    exp_scale = t * inv_sqrt_c * inv_u_norm
    out_norm = jnp.maximum(t * inv_sqrt_c, MIN_NORM)               # ||expmap0(xt)|| analytically
    proj3 = jnp.where(out_norm > maxnorm, maxnorm / out_norm, 1.0)

    o_ref[...] = ((exp_scale * proj3) * xt).astype(o_ref.dtype)


# --------------------------------- wrappers -----------------------------------

def _round_up(a, m):
    return ((a + m - 1) // m) * m


def _chip_config():
    """Generation-aware VMEM budget/limit and TensorCore count."""
    kind = ""
    try:
        kind = jax.devices()[0].device_kind.lower()
    except Exception:
        pass
    if ("v5" in kind) or ("v6" in kind):
        # 128 MiB physical VMEM; single TensorCore (v5e/v6e).
        return {"vmem_budget": 80 << 20, "vmem_limit": 96 << 20, "num_tensorcores": 1}
    # v7x (64 MiB VMEM, 2 TensorCores) or unknown generation: conservative & safe.
    return {"vmem_budget": 36 << 20, "vmem_limit": 48 << 20, "num_tensorcores": 2}


def _vmem_estimate(t, din_p, dout_p, x_bytes, w_bytes, o_bytes):
    pipe = 2 * t * (din_p * x_bytes + dout_p * o_bytes)   # double-buffered x / out tiles
    pipe += 2 * dout_p * 4 + 1024                         # resident bias + SMEM scalar
    weight = 2 * din_p * dout_p * w_bytes                 # resident weight (default 2 buffers)
    interm = t * (din_p + 5 * dout_p) * 4                 # live f32 wide temporaries
    return pipe + weight + interm


def prepare_hnn_params(weight, bias, c, *, mxu_dtype=jnp.bfloat16):
    """One-time parameter prep (hoisted out of the per-call path).

    weight: (dout, din) PyTorch layout; bias: (dout,).
    Returns padded, transposed weight (bf16 by default), hyp_bias = proj(expmap0(bias)),
    and y2 = ||hyp_bias||^2.
    """
    dout, din = weight.shape
    c = float(c)
    din_p = _round_up(din, 128)
    dout_p = _round_up(dout, 128)

    wT = weight.T.astype(mxu_dtype)
    if (din_p != din) or (dout_p != dout):
        wT = jnp.pad(wT, ((0, din_p - din), (0, dout_p - dout)))

    # proj_tan0 is identity on the PoincareBall.
    hyp_bias = _proj(_expmap0(bias.reshape(1, dout).astype(jnp.float32), c), c)
    if dout_p != dout:
        hyp_bias = jnp.pad(hyp_bias, ((0, 0), (0, dout_p - dout)))
    y2 = jnp.sum(hyp_bias * hyp_bias, axis=-1).astype(jnp.float32)   # shape (1,)

    return {"wT": wT, "hyp_bias": hyp_bias, "y2": y2,
            "c": c, "din": din, "dout": dout}


def hnn_apply(x, wT_p, hyp_bias_p, y2, *, c, dout, tm=512, out_dtype=None,
              vmem_budget_bytes=None):
    """Apply the HNN layer. x: (N, din); wT_p: (din_p, dout_p); hyp_bias_p: (1, dout_p)."""
    N, din = x.shape
    din_p, dout_p = wT_p.shape
    c = float(c)
    mxu_dtype = wT_p.dtype
    out_dtype = x.dtype if out_dtype is None else out_dtype

    cfg = _chip_config()
    budget = cfg["vmem_budget"] if vmem_budget_bytes is None else int(vmem_budget_bytes)

    # Lane-dense feature padding (only when needed): zero feature columns are exact
    # for every op here (norms, matmul, Mobius add, ReLU preserve zeros).
    x_p = x if din_p == din else jnp.pad(x, ((0, 0), (0, din_p - din)))

    # Row tiling: sublane multiple of 8; cdiv grid with a masked partial last tile
    # (no row-pad copy).  Split into >= 2 tiles only when there are 2 TensorCores.
    if N <= 8:
        tm_eff = N
    else:
        tm_eff = min(_round_up(int(tm), 8), _round_up(N, 8))
        if cfg["num_tensorcores"] > 1 and N >= 16:
            tm_eff = min(tm_eff, _round_up(pl.cdiv(N, 2), 8))
        xb = jnp.dtype(x.dtype).itemsize
        wb = jnp.dtype(mxu_dtype).itemsize
        ob = jnp.dtype(out_dtype).itemsize
        while tm_eff > 8 and _vmem_estimate(tm_eff, din_p, dout_p, xb, wb, ob) > budget:
            tm_eff = max(8, _round_up(tm_eff // 2, 8))

    grid = (pl.cdiv(N, tm_eff),)
    kernel = functools.partial(hnn_kernel, c=c, mxu_dtype=mxu_dtype)

    out_p = pl.pallas_call(
        kernel,
        out_shape=jax.ShapeDtypeStruct((N, dout_p), out_dtype),
        grid_spec=pltpu.PrefetchScalarGridSpec(
            num_scalar_prefetch=0,
            grid=grid,
            in_specs=[
                pl.BlockSpec((tm_eff, din_p), lambda i: (i, 0)),
                # weight / bias block indices never change -> stay resident, no re-DMA
                pl.BlockSpec((din_p, dout_p), lambda i: (0, 0)),
                pl.BlockSpec((1, dout_p), lambda i: (0, 0)),
                pl.BlockSpec(memory_space=pltpu.MemorySpace.SMEM),   # y2 scalar
            ],
            out_specs=pl.BlockSpec((tm_eff, dout_p), lambda i: (i, 0)),
        ),
        compiler_params=pltpu.CompilerParams(
            dimension_semantics=("parallel",),
            vmem_limit_bytes=cfg["vmem_limit"],
        ),
    )(x_p, wT_p, hyp_bias_p, y2)

    return out_p if dout_p == dout else out_p[:, :dout]


def hnn_layer(x, weight, bias, c, *, mxu_dtype=jnp.bfloat16, **kw):
    """Convenience wrapper: param prep + apply in one call."""
    p = prepare_hnn_params(weight, bias, c, mxu_dtype=mxu_dtype)
    return hnn_apply(x, p["wT"], p["hyp_bias"], p["y2"], c=p["c"], dout=p["dout"], **kw)


# ----------------------------------- main ------------------------------------

if __name__ == "__main__":
    N, din, dout = 16, 32, 32
    c = 1.0

    key = jax.random.PRNGKey(0)
    k_x, k_w = jax.random.split(key)

    # Input points on the Poincare ball (typical usage: expmap0 of tangent vecs).
    u = jax.random.normal(k_x, (N, din), jnp.float32) * 0.5
    x = _proj(_expmap0(u, c), c)

    # HypLinear params: xavier_uniform_(weight, gain=sqrt(2)); bias = 0.
    bound = math.sqrt(2.0) * math.sqrt(6.0 / (din + dout))
    weight = jax.random.uniform(k_w, (dout, din), jnp.float32, -bound, bound)
    bias = jnp.zeros((dout,), jnp.float32)

    # TODO(synk): dropout on the weight is omitted (eval mode / p=0 -> identity).
    params = prepare_hnn_params(weight, bias, c)            # one-time prep
    apply_fn = jax.jit(functools.partial(hnn_apply, c=float(c), dout=dout))
    out = apply_fn(x, params["wT"], params["hyp_bias"], params["y2"])
    jax.block_until_ready(out)
    assert out.shape == (N, dout)
    print("KERNEL_OK")
</pallas_src>

<mosaic_0001>
module attributes {stable_mosaic.version = 11 : i64} {
  func.func @hnn_kernel(%arg0: i32, %arg1: memref<8x128xf32, #tpu.memory_space<vmem>>, %arg2: memref<128x128xbf16, #tpu.memory_space<vmem>>, %arg3: memref<1x128xf32, #tpu.memory_space<vmem>>, %arg4: memref<1xf32, #tpu.memory_space<smem>>, %arg5: memref<8x128xf32, #tpu.memory_space<vmem>>) attributes {dimension_semantics = [#tpu.dimension_semantics<parallel>], iteration_bounds = array<i64: 2>, scalar_prefetch = 0 : i64, scratch_operands = 0 : i64, tpu.core_type = #tpu.core_type<tc>, window_params = [{transform_indices = @transform_0, window_bounds = array<i64: 8, 128>}, {pipeline_mode = #tpu.pipeline_mode<synchronous>, transform_indices = @transform_1, window_bounds = array<i64: 128, 128>}, {pipeline_mode = #tpu.pipeline_mode<synchronous>, transform_indices = @transform_2, window_bounds = array<i64: 1, 128>}, {transform_indices = @transform_3, window_bounds = array<i64: 1>}, {transform_indices = @transform_4, window_bounds = array<i64: 8, 128>}]} {
    %c0 = arith.constant 0 : index
    %c0_0 = arith.constant 0 : index
    %0 = vector.load %arg1[%c0, %c0_0] : memref<8x128xf32, #tpu.memory_space<vmem>>, vector<8x128xf32>
    %c0_1 = arith.constant 0 : index
    %c0_2 = arith.constant 0 : index
    %1 = vector.load %arg3[%c0_1, %c0_2] : memref<1x128xf32, #tpu.memory_space<vmem>>, vector<1x128xf32>
    %c0_3 = arith.constant 0 : index
    %2 = memref.load %arg4[%c0_3] : memref<1xf32, #tpu.memory_space<smem>>
    %3 = arith.truncf %0 : vector<8x128xf32> to vector<8x128xbf16>
    %c0_4 = arith.constant 0 : index
    %c0_5 = arith.constant 0 : index
    %4 = vector.load %arg2[%c0_4, %c0_5] : memref<128x128xbf16, #tpu.memory_space<vmem>>, vector<128x128xbf16>
    %cst = arith.constant dense<0.000000e+00> : vector<8x128xf32>
    %5 = tpu.matmul %3, %4, %cst {dimension_numbers = #tpu.dot_dimension_numbers<[1], [0], [0], [1], [0, 0, 1, 1], [], []>} : vector<8x128xbf16>, vector<128x128xbf16>, vector<8x128xf32> -> vector<8x128xf32>
    %6 = arith.mulf %0, %0 : vector<8x128xf32>
    %cst_6 = arith.constant dense<0.000000e+00> : vector<8xf32>
    %7 = vector.multi_reduction <add>, %6, %cst_6 [1] : vector<8x128xf32> to vector<8xf32>
    %8 = vector.shape_cast %7 : vector<8xf32> to vector<8x1xf32>
    %cst_7 = arith.constant 1.000000e-30 : f32
    %9 = vector.broadcast %cst_7 : f32 to vector<8x1xf32>
    %10 = arith.maximumf %8, %9 : vector<8x1xf32>
    %11 = math.rsqrt %10 : vector<8x1xf32>
    %12 = arith.mulf %8, %11 : vector<8x1xf32>
    %13 = arith.mulf %5, %5 : vector<8x128xf32>
    %cst_8 = arith.constant dense<0.000000e+00> : vector<8xf32>
    %14 = vector.multi_reduction <add>, %13, %cst_8 [1] : vector<8x128xf32> to vector<8xf32>
    %15 = vector.shape_cast %14 : vector<8xf32> to vector<8x1xf32>
    %cst_9 = arith.constant 1.000000e-30 : f32
    %16 = vector.broadcast %cst_9 : f32 to vector<8x1xf32>
    %17 = arith.maximumf %15, %16 : vector<8x1xf32>
    %18 = math.rsqrt %17 : vector<8x1xf32>
    %19 = arith.mulf %15, %18 : vector<8x1xf32>
    %cst_10 = arith.constant 1.000000e-15 : f32
    %20 = vector.broadcast %cst_10 : f32 to vector<8x1xf32>
    %21 = arith.maximumf %19, %20 : vector<8x1xf32>
    %22 = arith.mulf %21, %11 : vector<8x1xf32>
    %cst_11 = arith.constant 1.000000e+00 : f32
    %23 = vector.broadcast %cst_11 : f32 to vector<8x1xf32>
    %24 = arith.mulf %23, %12 : vector<8x1xf32>
    %cst_12 = arith.constant -0.99999988 : f32
    %cst_13 = arith.constant 0.99999988 : f32
    %25 = vector.broadcast %cst_12 : f32 to vector<8x1xf32>
    %26 = arith.maximumf %25, %24 : vector<8x1xf32>
    %27 = vector.broadcast %cst_13 : f32 to vector<8x1xf32>
    %28 = arith.minimumf %27, %26 : vector<8x1xf32>
    %29 = math.log1p %28 : vector<8x1xf32>
    %cst_14 = arith.constant 0.000000e+00 : f32
    %30 = vector.broadcast %cst_14 : f32 to vector<8x1xf32>
    %31 = arith.subf %30, %28 : vector<8x1xf32>
    %32 = math.log1p %31 : vector<8x1xf32>
    %33 = arith.subf %29, %32 : vector<8x1xf32>
    %cst_15 = arith.constant 5.000000e-01 : f32
    %34 = vector.broadcast %cst_15 : f32 to vector<8x1xf32>
    %35 = arith.mulf %34, %33 : vector<8x1xf32>
    %36 = arith.mulf %22, %35 : vector<8x1xf32>
    %37 = math.tanh %36 : vector<8x1xf32>
    %38 = arith.mulf %37, %18 : vector<8x1xf32>
    %cst_16 = arith.constant 1.000000e+00 : f32
    %39 = vector.broadcast %cst_16 : f32 to vector<8x1xf32>
    %40 = arith.mulf %38, %39 : vector<8x1xf32>
    %cst_17 = arith.constant 0.000000e+00 : f32
    %41 = vector.broadcast %cst_17 : f32 to vector<8x1xf32>
    %42 = arith.cmpf oeq, %15, %41 : vector<8x1xf32>
    %cst_18 = arith.constant 0.000000e+00 : f32
    %43 = vector.broadcast %cst_18 : f32 to vector<8x1xf32>
    %44 = arith.select %42, %43, %40 : vector<8x1xi1>, vector<8x1xf32>
    %45 = arith.mulf %44, %19 : vector<8x1xf32>
    %cst_19 = arith.constant 1.000000e-15 : f32
    %46 = vector.broadcast %cst_19 : f32 to vector<8x1xf32>
    %47 = arith.maximumf %45, %46 : vector<8x1xf32>
    %cst_20 = arith.constant 0.995999991 : f32
    %48 = vector.broadcast %cst_20 : f32 to vector<8x1xf32>
    %49 = arith.cmpf ogt, %47, %48 : vector<8x1xf32>
    %cst_21 = arith.constant 0.995999991 : f32
    %50 = vector.broadcast %cst_21 : f32 to vector<8x1xf32>
    %51 = arith.divf %50, %47 : vector<8x1xf32>
    %cst_22 = arith.constant 1.000000e+00 : f32
    %52 = vector.broadcast %cst_22 : f32 to vector<8x1xf32>
    %53 = arith.select %49, %51, %52 : vector<8x1xi1>, vector<8x1xf32>
    %54 = arith.mulf %44, %53 : vector<8x1xf32>
    %55 = vector.broadcast %54 : vector<8x1xf32> to vector<8x128xf32>
    %56 = arith.mulf %55, %5 : vector<8x128xf32>
    %cst_23 = arith.constant 0.995999991 : f32
    %57 = vector.broadcast %cst_23 : f32 to vector<8x1xf32>
    %58 = arith.minimumf %47, %57 : vector<8x1xf32>
    %59 = arith.mulf %58, %58 : vector<8x1xf32>
    %60 = vector.broadcast %1 : vector<1x128xf32> to vector<8x128xf32>
    %61 = arith.mulf %56, %60 : vector<8x128xf32>
    %cst_24 = arith.constant dense<0.000000e+00> : vector<8xf32>
    %62 = vector.multi_reduction <add>, %61, %cst_24 [1] : vector<8x128xf32> to vector<8xf32>
    %63 = vector.shape_cast %62 : vector<8xf32> to vector<8x1xf32>
    %cst_25 = arith.constant 2.000000e+00 : f32
    %64 = vector.broadcast %cst_25 : f32 to vector<8x1xf32>
    %65 = arith.mulf %64, %63 : vector<8x1xf32>
    %cst_26 = arith.constant 1.000000e+00 : f32
    %66 = vector.broadcast %cst_26 : f32 to vector<8x1xf32>
    %67 = arith.addf %66, %65 : vector<8x1xf32>
    %cst_27 = arith.constant 1.000000e+00 : f32
    %68 = arith.mulf %cst_27, %2 : f32
    %69 = vector.broadcast %68 : f32 to vector<8x1xf32>
    %70 = arith.addf %67, %69 : vector<8x1xf32>
    %cst_28 = arith.constant 1.000000e+00 : f32
    %71 = vector.broadcast %cst_28 : f32 to vector<8x1xf32>
    %72 = arith.mulf %71, %59 : vector<8x1xf32>
    %cst_29 = arith.constant 1.000000e+00 : f32
    %73 = vector.broadcast %cst_29 : f32 to vector<8x1xf32>
    %74 = arith.subf %73, %72 : vector<8x1xf32>
    %cst_30 = arith.constant 2.000000e+00 : f32
    %75 = vector.broadcast %cst_30 : f32 to vector<8x1xf32>
    %76 = arith.mulf %75, %63 : vector<8x1xf32>
    %cst_31 = arith.constant 1.000000e+00 : f32
    %77 = vector.broadcast %cst_31 : f32 to vector<8x1xf32>
    %78 = arith.addf %77, %76 : vector<8x1xf32>
    %cst_32 = arith.constant 1.000000e+00 : f32
    %79 = vector.broadcast %cst_32 : f32 to vector<8x1xf32>
    %80 = arith.mulf %79, %59 : vector<8x1xf32>
    %81 = vector.broadcast %2 : f32 to vector<8x1xf32>
    %82 = arith.mulf %80, %81 : vector<8x1xf32>
    %83 = arith.addf %78, %82 : vector<8x1xf32>
    %cst_33 = arith.constant 1.000000e-15 : f32
    %84 = vector.broadcast %cst_33 : f32 to vector<8x1xf32>
    %85 = arith.maximumf %83, %84 : vector<8x1xf32>
    %cst_34 = arith.constant 1.000000e+00 : f32
    %86 = vector.broadcast %cst_34 : f32 to vector<8x1xf32>
    %87 = arith.divf %86, %85 : vector<8x1xf32>
    %88 = arith.mulf %70, %87 : vector<8x1xf32>
    %89 = arith.mulf %74, %87 : vector<8x1xf32>
    %90 = vector.broadcast %88 : vector<8x1xf32> to vector<8x128xf32>
    %91 = arith.mulf %90, %56 : vector<8x128xf32>
    %92 = vector.broadcast %89 : vector<8x1xf32> to vector<8x128xf32>
    %93 = vector.broadcast %1 : vector<1x128xf32> to vector<8x128xf32>
    %94 = arith.mulf %92, %93 : vector<8x128xf32>
    %95 = arith.addf %91, %94 : vector<8x128xf32>
    %96 = arith.mulf %88, %88 : vector<8x1xf32>
    %97 = arith.mulf %96, %59 : vector<8x1xf32>
    %98 = arith.mulf %88, %89 : vector<8x1xf32>
    %cst_35 = arith.constant 2.000000e+00 : f32
    %99 = vector.broadcast %cst_35 : f32 to vector<8x1xf32>
    %100 = arith.mulf %99, %98 : vector<8x1xf32>
    %101 = arith.mulf %100, %63 : vector<8x1xf32>
    %102 = arith.addf %97, %101 : vector<8x1xf32>
    %103 = arith.mulf %89, %89 : vector<8x1xf32>
    %104 = vector.broadcast %2 : f32 to vector<8x1xf32>
    %105 = arith.mulf %103, %104 : vector<8x1xf32>
    %106 = arith.addf %102, %105 : vector<8x1xf32>
    %cst_36 = arith.constant 0.000000e+00 : f32
    %107 = vector.broadcast %cst_36 : f32 to vector<8x1xf32>
    %108 = arith.maximumf %106, %107 : vector<8x1xf32>
    %cst_37 = arith.constant 1.000000e-30 : f32
    %109 = vector.broadcast %cst_37 : f32 to vector<8x1xf32>
    %110 = arith.maximumf %108, %109 : vector<8x1xf32>
    %111 = math.rsqrt %110 : vector<8x1xf32>
    %112 = arith.mulf %108, %111 : vector<8x1xf32>
    %cst_38 = arith.constant 0.995999991 : f32
    %113 = vector.broadcast %cst_38 : f32 to vector<8x1xf32>
    %114 = arith.cmpf ogt, %112, %113 : vector<8x1xf32>
    %cst_39 = arith.constant 0.995999991 : f32
    %115 = vector.broadcast %cst_39 : f32 to vector<8x1xf32>
    %116 = arith.divf %115, %112 : vector<8x1xf32>
    %cst_40 = arith.constant 1.000000e+00 : f32
    %117 = vector.broadcast %cst_40 : f32 to vector<8x1xf32>
    %118 = arith.select %114, %116, %117 : vector<8x1xi1>, vector<8x1xf32>
    %cst_41 = arith.constant 0.995999991 : f32
    %119 = vector.broadcast %cst_41 : f32 to vector<8x1xf32>
    %120 = arith.minimumf %112, %119 : vector<8x1xf32>
    %cst_42 = arith.constant 0.995999991 : f32
    %121 = vector.broadcast %cst_42 : f32 to vector<8x1xf32>
    %122 = arith.cmpf ogt, %112, %121 : vector<8x1xf32>
    %cst_43 = arith.constant 1.00401604 : f32
    %123 = vector.broadcast %cst_43 : f32 to vector<8x1xf32>
    %124 = arith.select %122, %123, %111 : vector<8x1xi1>, vector<8x1xf32>
    %cst_44 = arith.constant 1.000000e+00 : f32
    %125 = vector.broadcast %cst_44 : f32 to vector<8x1xf32>
    %126 = arith.mulf %125, %120 : vector<8x1xf32>
    %cst_45 = arith.constant -0.99999988 : f32
    %cst_46 = arith.constant 0.99999988 : f32
    %127 = vector.broadcast %cst_45 : f32 to vector<8x1xf32>
    %128 = arith.maximumf %127, %126 : vector<8x1xf32>
    %129 = vector.broadcast %cst_46 : f32 to vector<8x1xf32>
    %130 = arith.minimumf %129, %128 : vector<8x1xf32>
    %131 = math.log1p %130 : vector<8x1xf32>
    %cst_47 = arith.constant 0.000000e+00 : f32
    %132 = vector.broadcast %cst_47 : f32 to vector<8x1xf32>
    %133 = arith.subf %132, %130 : vector<8x1xf32>
    %134 = math.log1p %133 : vector<8x1xf32>
    %135 = arith.subf %131, %134 : vector<8x1xf32>
    %cst_48 = arith.constant 5.000000e-01 : f32
    %136 = vector.broadcast %cst_48 : f32 to vector<8x1xf32>
    %137 = arith.mulf %136, %135 : vector<8x1xf32>
    %cst_49 = arith.constant 1.000000e+00 : f32
    %138 = vector.broadcast %cst_49 : f32 to vector<8x1xf32>
    %139 = arith.mulf %138, %137 : vector<8x1xf32>
    %140 = arith.mulf %139, %124 : vector<8x1xf32>
    %141 = arith.mulf %118, %140 : vector<8x1xf32>
    %cst_50 = arith.constant 0.000000e+00 : f32
    %142 = vector.broadcast %cst_50 : f32 to vector<8x128xf32>
    %143 = arith.maximumf %95, %142 : vector<8x128xf32>
    %144 = vector.broadcast %141 : vector<8x1xf32> to vector<8x128xf32>
    %145 = arith.mulf %144, %143 : vector<8x128xf32>
    %146 = arith.mulf %145, %145 : vector<8x128xf32>
    %cst_51 = arith.constant dense<0.000000e+00> : vector<8xf32>
    %147 = vector.multi_reduction <add>, %146, %cst_51 [1] : vector<8x128xf32> to vector<8xf32>
    %148 = vector.shape_cast %147 : vector<8xf32> to vector<8x1xf32>
    %cst_52 = arith.constant 1.000000e-30 : f32
    %149 = vector.broadcast %cst_52 : f32 to vector<8x1xf32>
    %150 = arith.maximumf %148, %149 : vector<8x1xf32>
    %151 = math.rsqrt %150 : vector<8x1xf32>
    %152 = arith.mulf %148, %151 : vector<8x1xf32>
    %cst_53 = arith.constant 1.000000e-15 : f32
    %153 = vector.broadcast %cst_53 : f32 to vector<8x1xf32>
    %154 = arith.maximumf %152, %153 : vector<8x1xf32>
    %cst_54 = arith.constant 1.000000e+00 : f32
    %155 = vector.broadcast %cst_54 : f32 to vector<8x1xf32>
    %156 = arith.mulf %155, %154 : vector<8x1xf32>
    %157 = math.tanh %156 : vector<8x1xf32>
    %cst_55 = arith.constant 1.000000e+00 : f32
    %158 = vector.broadcast %cst_55 : f32 to vector<8x1xf32>
    %159 = arith.mulf %157, %158 : vector<8x1xf32>
    %160 = arith.mulf %159, %151 : vector<8x1xf32>
    %cst_56 = arith.constant 1.000000e+00 : f32
    %161 = vector.broadcast %cst_56 : f32 to vector<8x1xf32>
    %162 = arith.mulf %157, %161 : vector<8x1xf32>
    %cst_57 = arith.constant 1.000000e-15 : f32
    %163 = vector.broadcast %cst_57 : f32 to vector<8x1xf32>
    %164 = arith.maximumf %162, %163 : vector<8x1xf32>
    %cst_58 = arith.constant 0.995999991 : f32
    %165 = vector.broadcast %cst_58 : f32 to vector<8x1xf32>
    %166 = arith.cmpf ogt, %164, %165 : vector<8x1xf32>
    %cst_59 = arith.constant 0.995999991 : f32
    %167 = vector.broadcast %cst_59 : f32 to vector<8x1xf32>
    %168 = arith.divf %167, %164 : vector<8x1xf32>
    %cst_60 = arith.constant 1.000000e+00 : f32
    %169 = vector.broadcast %cst_60 : f32 to vector<8x1xf32>
    %170 = arith.select %166, %168, %169 : vector<8x1xi1>, vector<8x1xf32>
    %171 = arith.mulf %160, %170 : vector<8x1xf32>
    %172 = vector.broadcast %171 : vector<8x1xf32> to vector<8x128xf32>
    %173 = arith.mulf %172, %145 : vector<8x128xf32>
    %c0_61 = arith.constant 0 : index
    %c0_62 = arith.constant 0 : index
    %174 = vector.load %arg5[%c0_61, %c0_62] : memref<8x128xf32, #tpu.memory_space<vmem>>, vector<8x128xf32>
    tpu.vector_store %arg5[%c0_61, %c0_62], %173 {strides = array<i32>} : memref<8x128xf32, #tpu.memory_space<vmem>>, vector<8x128xf32>,
    return
  }
  func.func @transform_0(%arg0: i32) -> (i32, i32) {
    %c0_i32 = arith.constant 0 : i32
    %c0_i32_0 = arith.constant 0 : i32
    return %arg0, %c0_i32 : i32, i32
  }
  func.func @transform_1(%arg0: i32) -> (i32, i32) {
    %c0_i32 = arith.constant 0 : i32
    %c0_i32_0 = arith.constant 0 : i32
    %c0_i32_1 = arith.constant 0 : i32
    return %c0_i32, %c0_i32_0 : i32, i32
  }
  func.func @transform_2(%arg0: i32) -> (i32, i32) {
    %c0_i32 = arith.constant 0 : i32
    %c0_i32_0 = arith.constant 0 : i32
    %c0_i32_1 = arith.constant 0 : i32
    return %c0_i32, %c0_i32_0 : i32, i32
  }
  func.func @transform_3(%arg0: i32) -> i32 {
    %c0_i32 = arith.constant 0 : i32
    %c0_i32_0 = arith.constant 0 : i32
    return %c0_i32 : i32
  }
  func.func @transform_4(%arg0: i32) -> (i32, i32) {
    %c0_i32 = arith.constant 0 : i32
    %c0_i32_0 = arith.constant 0 : i32
    return %arg0, %c0_i32 : i32, i32
  }
}

</mosaic_0001>

<llo_original>
// kernel: hnn_apply.1
$region0: #{hnn_apply.1}
  #allocation0 [shape = 'u32[]', space=smem, size = 0x4, offset = 0x4, fixed_abs, tag = 'smem constant byte address 0x4 - core index']
  #allocation1 [shape = 'u32[144,128]{1,0:T(1,128)}', space=vmem, size = 0x12000, scoped, tag = 'internal scratch']
  #allocation2 [shape = 'f32[1]{0:T(128)S(6)}', space=smem, size = 0x200, scoped, tag = 'scoped memory for hnn_apply.1']
  %s0 = inlined_call_operand.vmem [shape: f32[16,128], index: 0, kind: input, shape index: {}]
  %s1 = inlined_call_operand.hbm [shape: bf16[128,128], index: 1, kind: input, shape index: {}]
  %s2 = inlined_call_operand.vmem [shape: f32[1,128], index: 2, kind: input, shape index: {}]
  %s3 = inlined_call_operand.<no memory space> [shape: f32[1], index: 3, kind: input, shape index: {}]
  %s4 = inlined_call_operand.hbm [shape: f32[16,128], index: 4, kind: output, shape index: {}]
  %s5 = sld [smem:[#allocation0]]
  $region53: #{hnn_apply.1} parent=0
    _
  %s7 = ssub.s32 1, %s5
  %s8 = scalar_select 0, %s7, %s5
  %9 = sst [smem:[#allocation2]] %s3
  $region1: #{hnn_apply.1} parent=0
    #allocation3 [shape = 'u8[32768]{0}', space=vmem, size = 0x8000, scoped, tag = 'input window, operand 1, single buffered']
    #allocation4 [shape = 's32[2]{0}', space=sflag, size = 0x8, scoped, tag = 'scoped memory for hnn_apply.1']
    #allocation5 [shape = 's32[2]{0}', space=sflag, size = 0x8, scoped, tag = 'scoped memory for hnn_apply.1']
    #allocation6 [shape = 'u8[8192]{0}', space=vmem, size = 0x2000, scoped, tag = 'output window, operand 0']
    %10 = vsyncpa [#allocation4], 0
    %11 = vsyncpa [#allocation5], 0
    %s12 = scalar_lea.sflag [#allocation5], 1
    %13 = vsyncpa %s12, 0
    loop: start=0, step=1, limit=4
    $region2: #{hnn_apply.1} parent=1 // loop_pre_header
      _
    $region3: #{hnn_apply.1} parent=1 // loop_header
      %s15 = sphi 0, %s19
      %p16 = scmp.ge.s32.totalorder %s15, 4
      %s25 = sphi 0, %s27
      %s28 = sphi 0, %s25
      %s29 = sphi 0, %s28
      %s45 = sphi 0, %s29
      %s49 = sphi 0, %s49
      %s51 = sphi 0, %s49
      %s52 = sphi 0, %s51
      %s66 = sphi 0, %s52
      %s70 = sphi 0, %s70
      %s72 = sphi 0, %s70
      %s73 = sphi 0, %s72
      %s87 = sphi 0, %s73
      %s91 = sphi 0, %s91
      %s93 = sphi 0, %s91
      %s94 = sphi 0, %s93
      %s108 = sphi 0, %s94
      %s114 = sphi 0, %s116
      %s117 = sphi 0, %s114
      %s118 = sphi 0, %s117
      %s134 = sphi 0, %s118
    $region4: #{hnn_apply.1} parent=1 // loop_header_branch
      %18 = sbr.rel (%p16) target = $region8
    $region5: #{hnn_apply.1} parent=1 // loop_body
      %s20 = ssub.s32 %s15, 1
      %s21 = ssub.s32 %s15, 2
      %s22 = sadd.s32 %s15, 1
      %s23 = ssub.s32 %s15, %s22
      %p24 = scmp.eq.s32.totalorder %s23, 0
      %s26 = sadd.s32 %s25, 1
      %s27 = scalar_select %p24, %s25, %s26
      %p30 = pneg %p24
      %p31 = scmp.eq.s32.totalorder %s15, 1
      %p32 = por %p30, %p31
      %p33 = scmp.ne.s32.totalorder %s25, %s28
      %p34 = scmp.eq.s32.totalorder %s15, 0
      %p35 = por %p33, %p34
      %p36 = scmp.ne.s32.totalorder %s25, %s28
      %p37 = scmp.eq.s32.totalorder %s20, 1
      %p38 = por %p36, %p37
      %p39 = scmp.ne.s32.totalorder %s28, %s29
      %p40 = scmp.eq.s32.totalorder %s20, 0
      %p41 = por %p39, %p40
      %p42 = scmp.ne.s32.totalorder %s28, %s29
      %p43 = scmp.eq.s32.totalorder %s21, 1
      %p44 = por %p42, %p43
      %p46 = scmp.ne.s32.totalorder %s29, %s45
      %p47 = scmp.eq.s32.totalorder %s21, 0
      %p48 = por %p46, %p47
      %s50 = sadd.s32 %s49, 1
      %p53 = scmp.eq.s32.totalorder %s15, 1
      %p54 = scmp.ne.s32.totalorder %s49, %s51
      %p55 = scmp.eq.s32.totalorder %s15, 0
      %p56 = por %p54, %p55
      %p57 = scmp.ne.s32.totalorder %s49, %s51
      %p58 = scmp.eq.s32.totalorder %s20, 1
      %p59 = por %p57, %p58
      %p60 = scmp.ne.s32.totalorder %s51, %s52
      %p61 = scmp.eq.s32.totalorder %s20, 0
      %p62 = por %p60, %p61
      %p63 = scmp.ne.s32.totalorder %s51, %s52
      %p64 = scmp.eq.s32.totalorder %s21, 1
      %p65 = por %p63, %p64
      %p67 = scmp.ne.s32.totalorder %s52, %s66
      %p68 = scmp.eq.s32.totalorder %s21, 0
      %p69 = por %p67, %p68
      %s71 = sadd.s32 %s70, 1
      %p74 = scmp.eq.s32.totalorder %s15, 1
      %p75 = scmp.ne.s32.totalorder %s70, %s72
      %p76 = scmp.eq.s32.totalorder %s15, 0
      %p77 = por %p75, %p76
      %p78 = scmp.ne.s32.totalorder %s70, %s72
      %p79 = scmp.eq.s32.totalorder %s20, 1
      %p80 = por %p78, %p79
      %p81 = scmp.ne.s32.totalorder %s72, %s73
      %p82 = scmp.eq.s32.totalorder %s20, 0
      %p83 = por %p81, %p82
      %p84 = scmp.ne.s32.totalorder %s72, %s73
      %p85 = scmp.eq.s32.totalorder %s21, 1
      %p86 = por %p84, %p85
      %p88 = scmp.ne.s32.totalorder %s73, %s87
      %p89 = scmp.eq.s32.totalorder %s21, 0
      %p90 = por %p88, %p89
      %s92 = sadd.s32 %s91, 1
      %p95 = scmp.eq.s32.totalorder %s15, 1
      %p96 = scmp.ne.s32.totalorder %s91, %s93
      %p97 = scmp.eq.s32.totalorder %s15, 0
      %p98 = por %p96, %p97
      %p99 = scmp.ne.s32.totalorder %s91, %s93
      %p100 = scmp.eq.s32.totalorder %s20, 1
      %p101 = por %p99, %p100
      %p102 = scmp.ne.s32.totalorder %s93, %s94
      %p103 = scmp.eq.s32.totalorder %s20, 0
      %p104 = por %p102, %p103
      %p105 = scmp.ne.s32.totalorder %s93, %s94
      %p106 = scmp.eq.s32.totalorder %s21, 1
      %p107 = por %p105, %p106
      %p109 = scmp.ne.s32.totalorder %s94, %s108
      %p110 = scmp.eq.s32.totalorder %s21, 0
      %p111 = por %p109, %p110
      %s112 = ssub.s32 %s15, %s22
      %p113 = scmp.eq.s32.totalorder %s112, 0
      %s115 = sadd.s32 %s114, 1
      %s116 = scalar_select %p113, %s114, %s115
      %p119 = pneg %p113
      %p120 = scmp.eq.s32.totalorder %s15, 1
      %p121 = por %p119, %p120
      %p122 = scmp.ne.s32.totalorder %s114, %s117
      %p123 = scmp.eq.s32.totalorder %s15, 0
      %p124 = por %p122, %p123
      %p125 = scmp.ne.s32.totalorder %s114, %s117
      %p126 = scmp.eq.s32.totalorder %s20, 1
      %p127 = por %p125, %p126
      %p128 = scmp.ne.s32.totalorder %s117, %s118
      %p129 = scmp.eq.s32.totalorder %s20, 0
      %p130 = por %p128, %p129
      %p131 = scmp.ne.s32.totalorder %s117, %s118
      %p132 = scmp.eq.s32.totalorder %s21, 1
      %p133 = por %p131, %p132
      %p135 = scmp.ne.s32.totalorder %s118, %s134
      %p136 = scmp.eq.s32.totalorder %s21, 0
      %p137 = por %p135, %p136
      %p138 = scmp.le.s32.totalorder 1, %s15
      %p139 = scmp.lt.s32.totalorder %s15, 3
      %p140 = pnand %p138, %p139
      %p141 = pneg %p140
      // Predicated region
      $region9: #{hnn_apply.1} parent=5 // pred_check
        _
      $region10: #{hnn_apply.1} parent=5 // pred_check_branch
        %143 = sbr.rel (%p140) target = $region12
      $region11: #{hnn_apply.1} parent=5 // pred_region
        %s144 = ssub.s32 %s15, 1
        // Predicated region
        $region13: #{hnn_apply.1} parent=11 // pred_check
          %p145 = pneg %p62
        $region14: #{hnn_apply.1} parent=11 // pred_check_branch
          %147 = sbr.rel (%p145) target = $region16
        $region15: #{hnn_apply.1} parent=11 // pred_region
          %s149 = ssub.s32 1024, 1024
          %150 = vsyncadd [#allocation4], %s149
          %s151 = sshll.u32 [#allocation3], 4
          %s152 = int_to_ptr.vmem [resolvable:$true] %s151
          %157 = dma.hbm_to_vmem [thread:$0]  %s1, 1024, %s152, [#allocation4], 64, 64, 4
        $region16: #{hnn_apply.1} parent=11 // pred_fallthru
          _
        // Predicated region
        $region17: #{hnn_apply.1} parent=11 // pred_check
          %p158 = pneg %p83
        $region18: #{hnn_apply.1} parent=11 // pred_check_branch
          %160 = sbr.rel (%p158) target = $region20
        $region19: #{hnn_apply.1} parent=11 // pred_region
          _
        $region20: #{hnn_apply.1} parent=11 // pred_fallthru
          _
        // Predicated region
        $region21: #{hnn_apply.1} parent=11 // pred_check
          %p161 = pneg %p104
        $region22: #{hnn_apply.1} parent=11 // pred_check_branch
          %163 = sbr.rel (%p161) target = $region24
        $region23: #{hnn_apply.1} parent=11 // pred_region
          _
        $region24: #{hnn_apply.1} parent=11 // pred_fallthru
          _
      $region12: #{hnn_apply.1} parent=5 // pred_fallthru
        _
      %p164 = scmp.lt.s32.totalorder %s15, 2
      // Predicated region
      $region25: #{hnn_apply.1} parent=5 // pred_check
        %p165 = pneg %p164
      $region26: #{hnn_apply.1} parent=5 // pred_check_branch
        %167 = sbr.rel (%p165) target = $region28
      $region27: #{hnn_apply.1} parent=5 // pred_region
        // Predicated region
        $region29: #{hnn_apply.1} parent=27 // pred_check
          %p168 = pneg %p35
        $region30: #{hnn_apply.1} parent=27 // pred_check_branch
          %170 = sbr.rel (%p168) target = $region32
        $region31: #{hnn_apply.1} parent=27 // pred_region
          %p171 = scmp.lt.s32.totalorder %s15, 1
          %s172 = scalar_select %p171, %s15, 1
          %s173 = smul.addr %s172, 8
          %s174 = scalar_lea.vmem %s0, %s173
        $region32: #{hnn_apply.1} parent=27 // pred_fallthru
          _
      $region28: #{hnn_apply.1} parent=5 // pred_fallthru
        _
      %p175 = scmp.le.s32.totalorder 1, %s15
      %p176 = scmp.lt.s32.totalorder %s15, 3
      %p177 = pnand %p175, %p176
      %p178 = pneg %p177
      // Predicated region
      $region33: #{hnn_apply.1} parent=5 // pred_check
        _
      $region34: #{hnn_apply.1} parent=5 // pred_check_branch
        %180 = sbr.rel (%p177) target = $region36
      $region35: #{hnn_apply.1} parent=5 // pred_region
        %s181 = ssub.s32 %s15, 1
        // Predicated region
        $region37: #{hnn_apply.1} parent=35 // pred_check
          %p182 = pneg %p62
        $region38: #{hnn_apply.1} parent=35 // pred_check_branch
          %184 = sbr.rel (%p182) target = $region40
        $region39: #{hnn_apply.1} parent=35 // pred_region
          %185 = dma.done [#allocation4], 1024
        $region40: #{hnn_apply.1} parent=35 // pred_fallthru
          _
        %p186 = scmp.lt.s32.totalorder %s20, 1
        %s187 = scalar_select %p186, %s20, 1
        %s188 = smul.addr %s187, 8
        %s189 = scalar_lea.vmem %s0, %s188
        %p190 = pneg %p41
        %p191 = pneg %p38
        %p192 = pneg %p62
        %p193 = pneg %p59
        %p194 = pneg %p83
        %p195 = pneg %p80
        %p196 = pneg %p104
        %p197 = pneg %p101
        %p198 = pneg %p130
        %p199 = pneg %p127
        %s200 = sand.u32 %s117, 1
        %s201 = scalar_lea.sflag [#allocation5], %s200
        %s202 = sand.u32 %s117, 1
        %s203 = smul.addr %s202, 8
        %s204 = scalar_lea.vmem [#allocation6], %s203
        %p205 = scmp.lt.s32.totalorder %s20, 1
        %s206 = scalar_select %p205, %s20, 1
        %s207 = smul.addr %s206, 8
        %s208 = scalar_lea.vmem %s0, %s207
        %v210 = vld [vmem:[%s208] sm:$0xff]
        %v211 = vld [vmem:[%s2] sm:$0x1]
        %s212 = sld [smem:[#allocation2]]
        %v213 = vpack.c.bf16 %v210, %v210
        %v214 = vld [vmem:[#allocation3] sm:$0xf]
        %v215 = vld [vmem:[#allocation3 + $0x4] sm:$0xf]
        %v216 = vld [vmem:[#allocation3 + $0x8] sm:$0xf]
        %v217 = vld [vmem:[#allocation3 + $0xc] sm:$0xf]
        %v218 = vld [vmem:[#allocation3 + $0x10] sm:$0xf]
        %v219 = vld [vmem:[#allocation3 + $0x14] sm:$0xf]
        %v220 = vld [vmem:[#allocation3 + $0x18] sm:$0xf]
        %v221 = vld [vmem:[#allocation3 + $0x1c] sm:$0xf]
        %v222 = vld [vmem:[#allocation3 + $0x20] sm:$0xf]
        %v223 = vld [vmem:[#allocation3 + $0x24] sm:$0xf]
        %v224 = vld [vmem:[#allocation3 + $0x28] sm:$0xf]
        %v225 = vld [vmem:[#allocation3 + $0x2c] sm:$0xf]
        %v226 = vld [vmem:[#allocation3 + $0x30] sm:$0xf]
        %v227 = vld [vmem:[#allocation3 + $0x34] sm:$0xf]
        %v228 = vld [vmem:[#allocation3 + $0x38] sm:$0xf]
        %v229 = vld [vmem:[#allocation3 + $0x3c] sm:$0xf]
        %v246 = vunpack.c.l.b16 %v214
        %v247 = vunpack.c.l.b16 %v215
        %v248 = vunpack.c.l.b16 %v216
        %v249 = vunpack.c.l.b16 %v217
        %v250 = vunpack.c.l.b16 %v218
        %v251 = vunpack.c.l.b16 %v219
        %v252 = vunpack.c.l.b16 %v220
        %v253 = vunpack.c.l.b16 %v221
        %v254 = vunpack.c.l.b16 %v222
        %v255 = vunpack.c.l.b16 %v223
        %v256 = vunpack.c.l.b16 %v224
        %v257 = vunpack.c.l.b16 %v225
        %v258 = vunpack.c.l.b16 %v226
        %v259 = vunpack.c.l.b16 %v227
        %v260 = vunpack.c.l.b16 %v228
        %v261 = vunpack.c.l.b16 %v229
        %v262 = vpack.c.b16 %v247, %v246
        %v263 = vpack.c.b16 %v249, %v248
        %v264 = vpack.c.b16 %v251, %v250
        %v265 = vpack.c.b16 %v253, %v252
        %v266 = vpack.c.b16 %v255, %v254
        %v267 = vpack.c.b16 %v257, %v256
        %v268 = vpack.c.b16 %v259, %v258
        %v269 = vpack.c.b16 %v261, %v260
        %278 = vmatprep.subr.bf16.mxu0 0
        %279 = vmatpush1.bf16.msra.mxu0 %v262
        %280 = vmatprep.subr.bf16.mxu0 0
        %281 = vmatpush1.bf16.msra.mxu0 %v263
        %282 = vmatprep.subr.bf16.mxu0 0
        %283 = vmatpush1.bf16.msra.mxu0 %v264
        %284 = vmatprep.subr.bf16.mxu0 0
        %285 = vmatpush1.bf16.msra.mxu0 %v265
        %286 = vmatprep.subr.bf16.mxu0 0
        %287 = vmatpush1.bf16.msra.mxu0 %v266
        %288 = vmatprep.subr.bf16.mxu0 0
        %289 = vmatpush1.bf16.msra.mxu0 %v267
        %290 = vmatprep.subr.bf16.mxu0 0
        %291 = vmatpush1.bf16.msra.mxu0 %v268
        %292 = vmatprep.subr.bf16.mxu0 0
        %293 = vmatpush1.bf16.msra.mxu0 %v269
        %294 = vmatprep.subr.bf16.mxu0 0
        %295 = vmatpush1.bf16.msra.mxu0 0
        %296 = vmatprep.subr.bf16.mxu0 0
        %297 = vmatpush1.bf16.msra.mxu0 0
        %298 = vmatprep.subr.bf16.mxu0 0
        %299 = vmatpush1.bf16.msra.mxu0 0
        %300 = vmatprep.subr.bf16.mxu0 0
        %301 = vmatpush1.bf16.msra.mxu0 0
        %302 = vmatprep.subr.bf16.mxu0 0
        %303 = vmatpush1.bf16.msra.mxu0 0
        %304 = vmatprep.subr.bf16.mxu0 0
        %305 = vmatpush1.bf16.msra.mxu0 0
        %306 = vmatprep.subr.bf16.mxu0 0
        %307 = vmatpush1.bf16.msra.mxu0 0
        %308 = vmatprep.subr.bf16.mxu0 0
        %309 = vmatpush1.bf16.msra.mxu0 0
        %310 = vmatprep.mubr.bf16.mxu0 0
        %311 = vmatmul.mubr.bf16.gmra.mrb[0].mxu0 %v213
        %v312 = vpop.f32.mrb[0].mxu0
        %v313 = vadd.f32 0.0, %v312
        %v314 = vpop.f32.mrb[0].mxu0
        %v315 = vpop.f32.mrb[0].mxu0
        %v316 = vpop.f32.mrb[0].mxu0
        %317 = vdwg.mxu0
        %v318 = vmul.f32 %v210, %v210
        %319 = vadd.xlane.f32.xlu0 %v318
        %v320 = vpop.xlane.xlu0 %319
        %v321 = vmax.f32 %v320, 1e-30
        %v322 = vrsqrt.pop %v321
        %v323 = vmul.f32 %v320, %v322
        %v324 = vmul.f32 %v313, %v313
        %325 = vadd.xlane.f32.xlu0 %v324
        %v326 = vpop.xlane.xlu0 %325
        %v327 = vmax.f32 %v326, 1e-30
        %v328 = vrsqrt.pop %v327
        %v329 = vmul.f32 %v326, %v328
        %v330 = vmax.f32 %v329, 1e-15
        %v331 = vmul.f32 %v330, %v322
        %v332 = vmax.f32 %v323, -0.9999999
        %v333 = vmin.f32 %v332, 0.9999999
        %v334 = vadd.f32 %v333, 1.0
        %v335 = vlog2.pop %v334
        %v336 = vmul.f32 %v335, 0.6931472
        %v337 = vmul.f32 -0.5, %v333
        %v338 = vadd.f32 %v337, 1.0
        %v339 = vmul.f32 %v338, %v333
        %v340 = vand.u32 2147483647, %v333
        %vm341 = vcmp.lt.f32.partialorder %v340, 0.0004427343
        %v342 = vsel %vm341, %v339, %v336
        %v343 = vsub.f32 0.0, %v333
        %v344 = vadd.f32 %v343, 1.0
        %v345 = vlog2.pop %v344
        %v346 = vmul.f32 %v345, 0.6931472
        %v347 = vmul.f32 -0.5, %v343
        %v348 = vadd.f32 %v347, 1.0
        %v349 = vmul.f32 %v348, %v343
        %v350 = vand.u32 2147483647, %v343
        %vm351 = vcmp.lt.f32.partialorder %v350, 0.0004427343
        %v352 = vsel %vm351, %v349, %v346
        %v353 = vsub.f32 %v342, %v352
        %v354 = vmul.f32 %v353, 0.5
        %v355 = vmul.f32 %v331, %v354
        %v356 = vtanh.pop %v355
        %v357 = vmul.f32 %v356, %v328
        %vm358 = vcmp.eq.f32.partialorder %v326, 0.0
        %v359 = vsel %vm358, 0.0, %v357
        %v360 = vmul.f32 %v359, %v329
        %v361 = vmax.f32 %v360, 1e-15
        %vm362 = vcmp.gt.f32.partialorder %v361, 0.996
        %v363 = vrcp.pop %v361
        %v364 = vmul.f32 0.996, %v363
        %v365 = vsel %vm362, %v364, 1.0
        %v366 = vmul.f32 %v359, %v365
        %v367 = vmul.f32 %v366, %v313
        %v368 = vmin.f32 %v361, 0.996
        %v369 = vmul.f32 %v368, %v368
        %v371 = vlaneseq
        %v372 = vshrl.u32 %v371, 7
        %v373 = vsub.s32 0, %v372
        %v374 = vrot.slane %v211, %v373
        %v376 = vmul.f32 %v367, %v374
        %377 = vadd.xlane.f32.xlu0 %v376
        %v378 = vpop.xlane.xlu0 %377
        %v379 = vmul.f32 %v378, 2.0
        %v380 = vadd.f32 %v379, 1.0
        %v381 = vstv %s212
        %v382 = vadd.f32 %v380, %v381
        %v383 = vsub.f32 1.0, %v369
        %v384 = vmul.f32 %v369, %v381
        %v385 = vadd.f32 %v380, %v384
        %v386 = vmax.f32 %v385, 1e-15
        %v387 = vrcp.pop %v386
        %v388 = vmul.f32 1.0, %v387
        %v389 = vmul.f32 %v382, %v388
        %v390 = vmul.f32 %v383, %v388
        %v391 = vmul.f32 %v389, %v367
        %v392 = vmul.f32 %v390, %v374
        %v393 = vadd.f32 %v391, %v392
        %v394 = vmul.f32 %v389, %v389
        %v395 = vmul.f32 %v394, %v369
        %v396 = vmul.f32 %v389, %v390
        %v397 = vmul.f32 %v396, 2.0
        %v398 = vmul.f32 %v397, %v378
        %v399 = vadd.f32 %v395, %v398
        %v400 = vmul.f32 %v390, %v390
        %v401 = vmul.f32 %v400, %v381
        %v402 = vadd.f32 %v399, %v401
        %v403 = vmax.f32 %v402, 0.0
        %v404 = vmax.f32 %v403, 1e-30
        %v405 = vrsqrt.pop %v404
        %v406 = vmul.f32 %v403, %v405
        %vm407 = vcmp.gt.f32.partialorder %v406, 0.996
        %v408 = vrcp.pop %v406
        %v409 = vmul.f32 0.996, %v408
        %v410 = vsel %vm407, %v409, 1.0
        %v411 = vmin.f32 %v406, 0.996
        %v412 = vsel %vm407, 1.004016, %v405
        %v413 = vmax.f32 %v411, -0.9999999
        %v414 = vmin.f32 %v413, 0.9999999
        %v415 = vadd.f32 %v414, 1.0
        %v416 = vlog2.pop %v415
        %v417 = vmul.f32 %v416, 0.6931472
        %v418 = vmul.f32 -0.5, %v414
        %v419 = vadd.f32 %v418, 1.0
        %v420 = vmul.f32 %v419, %v414
        %v421 = vand.u32 2147483647, %v414
        %vm422 = vcmp.lt.f32.partialorder %v421, 0.0004427343
        %v423 = vsel %vm422, %v420, %v417
        %v424 = vsub.f32 0.0, %v414
        %v425 = vadd.f32 %v424, 1.0
        %v426 = vlog2.pop %v425
        %v427 = vmul.f32 %v426, 0.6931472
        %v428 = vmul.f32 -0.5, %v424
        %v429 = vadd.f32 %v428, 1.0
        %v430 = vmul.f32 %v429, %v424
        %v431 = vand.u32 2147483647, %v424
        %vm432 = vcmp.lt.f32.partialorder %v431, 0.0004427343
        %v433 = vsel %vm432, %v430, %v427
        %v434 = vsub.f32 %v423, %v433
        %v435 = vmul.f32 %v434, 0.5
        %v436 = vmul.f32 %v435, %v412
        %v437 = vmul.f32 %v410, %v436
        %v438 = vmax.f32 %v393, 0.0
        %v439 = vmul.f32 %v437, %v438
        %v440 = vmul.f32 %v439, %v439
        %441 = vadd.xlane.f32.xlu0 %v440
        %v442 = vpop.xlane.xlu0 %441
        %v443 = vmax.f32 %v442, 1e-30
        %v444 = vrsqrt.pop %v443
        %v445 = vmul.f32 %v442, %v444
        %v446 = vmax.f32 %v445, 1e-15
        %v447 = vtanh.pop %v446
        %v448 = vmul.f32 %v447, %v444
        %v449 = vmax.f32 %v447, 1e-15
        %vm450 = vcmp.gt.f32.partialorder %v449, 0.996
        %v451 = vrcp.pop %v449
        %v452 = vmul.f32 0.996, %v451
        %v453 = vsel %vm450, %v452, 1.0
        %v454 = vmul.f32 %v448, %v453
        %v455 = vmul.f32 %v454, %v439
        %456 = vst [vmem:[%s204] sm:$0xff] %v455
        %s457 = sand.u32 %s117, 1
        %s458 = scalar_lea.sflag [#allocation5], %s457
        %s459 = sand.u32 %s117, 1
        %s460 = smul.addr %s459, 8
        %s461 = scalar_lea.vmem [#allocation6], %s460
        // Predicated region
        $region41: #{hnn_apply.1} parent=35 // pred_check
          %p462 = pneg %p127
        $region42: #{hnn_apply.1} parent=35 // pred_check_branch
          %464 = sbr.rel (%p462) target = $region44
        $region43: #{hnn_apply.1} parent=35 // pred_region
          %s466 = ssub.s32 128, 128
          %467 = vsyncadd %s458, %s466
          %s468 = smul.addr %s20, 128
          %s469 = scalar_lea.hbm %s4, %s468
          %s471 = sshll.u32 %s461, 4
          %s472 = int_to_ptr.vmem [resolvable:$true] %s471
          %474 = dma.vmem_to_hbm [thread:$0]  %s472, 128, %s469, %s458
        $region44: #{hnn_apply.1} parent=35 // pred_fallthru
          _
      $region36: #{hnn_apply.1} parent=5 // pred_fallthru
        _
      %p475 = scmp.le.s32.totalorder 2, %s15
      // Predicated region
      $region45: #{hnn_apply.1} parent=5 // pred_check
        %p476 = pneg %p475
      $region46: #{hnn_apply.1} parent=5 // pred_check_branch
        %478 = sbr.rel (%p476) target = $region48
      $region47: #{hnn_apply.1} parent=5 // pred_region
        %s479 = ssub.s32 %s15, 2
        // Predicated region
        $region49: #{hnn_apply.1} parent=47 // pred_check
          %p480 = pneg %p133
        $region50: #{hnn_apply.1} parent=47 // pred_check_branch
          %482 = sbr.rel (%p480) target = $region52
        $region51: #{hnn_apply.1} parent=47 // pred_region
          %s483 = sand.u32 %s118, 1
          %s484 = scalar_lea.sflag [#allocation5], %s483
          %s485 = sand.u32 %s118, 1
          %s486 = smul.addr %s485, 8
          %s487 = scalar_lea.vmem [#allocation6], %s486
          %488 = dma.done %s484, 128
        $region52: #{hnn_apply.1} parent=47 // pred_fallthru
          _
      $region48: #{hnn_apply.1} parent=5 // pred_fallthru
        _
    $region6: #{hnn_apply.1} parent=1 // loop_footer
      %s19 = sadd.s32 1, %s15
    $region7: #{hnn_apply.1} parent=1 // loop_footer_branch
      %14 = sbr.rel target = $region3
    $region8: #{hnn_apply.1} parent=1 // loop_exit
      _
    %489 = vsyncpa [#allocation4], 1
    %s490 = scalar_lea.sflag [#allocation4], 1
    %491 = vsyncpa %s490, 1
    %492 = vsyncpa [#allocation5], 1
    %s493 = scalar_lea.sflag [#allocation5], 1
    %494 = vsyncpa %s493, 1

</llo_original>
